<compile_context>
chip_gen: v7x
topology: tpu7x:2x2x1
jax: 0.10.0
libtpu: 0.0.40
codegen_flags: <defaults>
</compile_context>

<pallas_src>
import functools
import math

import jax
import jax.numpy as jnp
import numpy as np
from jax.experimental import pallas as pl
from jax.experimental.pallas import tpu as pltpu


# ----------------------------------------------------------------------------
# Haar analysis filters, reversed as in the PyTorch module
# (dec_lo[::-1], dec_hi[::-1]).
# ----------------------------------------------------------------------------
_S = 1.0 / math.sqrt(2.0)
W_LO = np.array([_S, _S], dtype=np.float32)    # dec_lo[::-1]
W_HI = np.array([_S, -_S], dtype=np.float32)   # dec_hi[::-1]

_TN = 128       # output columns per tile (lane-dense)
_TC_MAX = 512   # max channel rows per tile


def _round_up(v: int, m: int) -> int:
    return -(-v // m) * m


def _haar_packet_filters() -> np.ndarray:
    """(4, 4) composed 2-level filters, band order [lo_lo, lo_hi, hi_lo, hi_hi].

    Band b output:  y_b[t] = sum_k F[b, k] * x[4*t + k]
    (composed filter of level-1 filter w1 and level-2 filter w2 = kron(w2, w1)).
    """
    # TODO(synk): general (K>2 tap) wavelets have composed support 3K-2 > 4 and
    # need overlapping (halo) input windows; this kernel hardcodes Haar like the
    # original reference implementation.
    bands = [(W_LO, W_LO), (W_LO, W_HI), (W_HI, W_LO), (W_HI, W_HI)]
    return np.stack([np.kron(w2, w1) for (w1, w2) in bands]).astype(np.float32)


def _merged_banded_weight(tn: int) -> np.ndarray:
    """Merged shifted-stencil weight (4*tn, 4*tn): W[4t+k, b*tn+t] = F[b, k]."""
    F = _haar_packet_filters()                      # (4 bands, 4 taps)
    W = np.zeros((4 * tn, 4 * tn), dtype=np.float32)
    for t in range(tn):
        for b in range(4):
            W[4 * t:4 * t + 4, b * tn + t] = F[b]
    return W


# ----------------------------------------------------------------------------
# Pallas kernel: one banded MXU matmul per (channel-tile, col-tile) step.
# ----------------------------------------------------------------------------
def _dwpt_band_kernel(x_ref, w_ref, o_ref):
    # x_ref: (TC, 4*TN)   w_ref: (4*TN, 4*TN)   o_ref: (4, TC, TN)
    tn = o_ref.shape[-1]
    res = jnp.dot(x_ref[...], w_ref[...], preferred_element_type=jnp.float32)
    for b in range(4):  # static unroll: 128-aligned lane slices, free in-vreg
        o_ref[b] = res[:, b * tn:(b + 1) * tn].astype(o_ref.dtype)


@functools.partial(jax.jit, static_argnames=("use_bf16",))
def dwpt_1d(x: jax.Array, *, use_bf16: bool = False) -> jax.Array:
    """2-level Haar DWPT along the last axis.

    x: (N, C, L) -> (N, 4*C, L2) float32, channel order
    [lo_lo(C), lo_hi(C), hi_lo(C), hi_hi(C)], identical to the PyTorch module.
    """
    N, C, L = x.shape
    assert L >= 4, "need at least 4 samples for a 2-level Haar DWPT"
    L1 = (L - 2) // 2 + 1
    L2 = (L1 - 2) // 2 + 1

    compute_dtype = jnp.bfloat16 if use_bf16 else jnp.float32

    # --- channel tiling (second-to-last block dim must be a multiple of 8) ---
    c8 = _round_up(C, 8)
    tc = min(_TC_MAX, c8)
    c_p = _round_up(c8, tc)

    # --- output-column tiling (lane-dense, multiples of 128) ---
    tn = _TN
    l2_p = _round_up(L2, tn)

    # Only the first 4*L2 input columns are ever used by the stencil; pad
    # channels / columns with zeros so the grid divides evenly (padded outputs
    # are sliced off below and never mix with real data thanks to the banding).
    x_u = x if L == 4 * L2 else x[..., : 4 * L2]
    x_u = x_u.astype(compute_dtype)
    pad_c, pad_l = c_p - C, 4 * (l2_p - L2)
    if pad_c or pad_l:
        x_u = jnp.pad(x_u, ((0, 0), (0, pad_c), (0, pad_l)))

    w = jnp.asarray(_merged_banded_weight(tn)).astype(compute_dtype)

    grid = (N, c_p // tc, l2_p // tn)

    # VMEM/step (f32, tc=512, tn=128): x tile 1 MiB + out tile 1 MiB, each
    # double-buffered, + 1 MiB resident weight block -> ~5 MiB; fine everywhere.
    out_p = pl.pallas_call(
        _dwpt_band_kernel,
        out_shape=jax.ShapeDtypeStruct((N, 4, c_p, l2_p), jnp.float32),
        grid=grid,
        in_specs=[
            pl.BlockSpec((None, tc, 4 * tn), lambda n, ci, ti: (n, ci, ti)),
            pl.BlockSpec((4 * tn, 4 * tn), lambda n, ci, ti: (0, 0)),
        ],
        out_specs=pl.BlockSpec(
            (None, 4, tc, tn), lambda n, ci, ti: (n, 0, ci, ti)
        ),
        compiler_params=pltpu.CompilerParams(
            dimension_semantics=("parallel", "parallel", "parallel"),
        ),
    )(x_u, w)

    # (N, 4, C, L2) -> (N, 4*C, L2): free view; matches torch.cat along dim=1.
    return out_p[:, :, :C, :L2].reshape(N, 4 * C, L2)


# ----------------------------------------------------------------------------
# Pure-JAX reference (direct depthwise strided conv) for the correctness check.
# ----------------------------------------------------------------------------
def _ref_dwpt_1d(x: jax.Array) -> jax.Array:
    def dwconv(z, w):
        K = w.shape[0]
        Lout = (z.shape[-1] - K) // 2 + 1
        acc = jnp.zeros(z.shape[:-1] + (Lout,), jnp.float32)
        for k in range(K):
            acc = acc + w[k] * z[..., k:k + 2 * Lout:2]
        return acc

    wl = jnp.asarray(W_LO)
    wh = jnp.asarray(W_HI)
    xl = dwconv(x, wl)
    xh = dwconv(x, wh)
    return jnp.concatenate(
        [dwconv(xl, wl), dwconv(xl, wh), dwconv(xh, wl), dwconv(xh, wh)],
        axis=1,
    )


if __name__ == "__main__":
    key = jax.random.PRNGKey(0)
    N, C, L = 2, 4, 16                      # matches torch input layout (N, C, L)
    x = jax.random.normal(key, (N, C, L), dtype=jnp.float32)

    out = jax.block_until_ready(dwpt_1d(x))
    ref = np.asarray(_ref_dwpt_1d(x))

    L2 = (((L - 2) // 2 + 1) - 2) // 2 + 1
    assert out.shape == (N, 4 * C, L2), out.shape
    np.testing.assert_allclose(np.asarray(out), ref, rtol=1e-5, atol=1e-5)

    # Optional bf16 compute path (v6e/v7x MXU, halved HBM traffic); looser tol.
    out_bf16 = jax.block_until_ready(dwpt_1d(x, use_bf16=True))
    np.testing.assert_allclose(np.asarray(out_bf16), ref, rtol=5e-2, atol=5e-2)

    print("KERNEL_OK")
</pallas_src>

<mosaic_0001>
module attributes {stable_mosaic.version = 11 : i64} {
  func.func @_dwpt_band_kernel(%arg0: i32, %arg1: i32, %arg2: i32, %arg3: memref<1x8x512xf32, #tpu.memory_space<vmem>>, %arg4: memref<512x512xf32, #tpu.memory_space<vmem>>, %arg5: memref<1x4x8x128xf32, #tpu.memory_space<vmem>>) attributes {dimension_semantics = [#tpu.dimension_semantics<parallel>, #tpu.dimension_semantics<parallel>, #tpu.dimension_semantics<parallel>], iteration_bounds = array<i64: 2, 1, 1>, scalar_prefetch = 0 : i64, scratch_operands = 0 : i64, tpu.core_type = #tpu.core_type<tc>, window_params = [{transform_indices = @transform_0, window_bounds = array<i64: 1, 8, 512>}, {pipeline_mode = #tpu.pipeline_mode<synchronous>, transform_indices = @transform_1, window_bounds = array<i64: 512, 512>}, {transform_indices = @transform_2, window_bounds = array<i64: 1, 4, 8, 128>}]} {
    %c0 = arith.constant 0 : index
    %c0_0 = arith.constant 0 : index
    %c0_1 = arith.constant 0 : index
    %0 = vector.load %arg3[%c0, %c0_0, %c0_1] : memref<1x8x512xf32, #tpu.memory_space<vmem>>, vector<1x8x512xf32>
    %1 = vector.shape_cast %0 : vector<1x8x512xf32> to vector<8x512xf32>
    %c0_2 = arith.constant 0 : index
    %c0_3 = arith.constant 0 : index
    %2 = vector.load %arg4[%c0_2, %c0_3] : memref<512x512xf32, #tpu.memory_space<vmem>>, vector<512x512xf32>
    %cst = arith.constant dense<0.000000e+00> : vector<8x512xf32>
    %3 = tpu.matmul %1, %2, %cst {dimension_numbers = #tpu.dot_dimension_numbers<[1], [0], [0], [1], [0, 0, 1, 1], [], []>} : vector<8x512xf32>, vector<512x512xf32>, vector<8x512xf32> -> vector<8x512xf32>
    %4 = vector.extract_strided_slice %3 {offsets = [0, 0], sizes = [8, 128], strides = [1, 1]} : vector<8x512xf32> to vector<8x128xf32>
    %c0_4 = arith.constant 0 : index
    %c0_5 = arith.constant 0 : index
    %c0_6 = arith.constant 0 : index
    %c0_7 = arith.constant 0 : index
    %5 = vector.load %arg5[%c0_4, %c0_5, %c0_6, %c0_7] : memref<1x4x8x128xf32, #tpu.memory_space<vmem>>, vector<1x1x8x128xf32>
    %6 = vector.shape_cast %5 : vector<1x1x8x128xf32> to vector<8x128xf32>
    %7 = vector.shape_cast %4 : vector<8x128xf32> to vector<1x1x8x128xf32>
    tpu.vector_store %arg5[%c0_4, %c0_5, %c0_6, %c0_7], %7 {strides = array<i32>} : memref<1x4x8x128xf32, #tpu.memory_space<vmem>>, vector<1x1x8x128xf32>,
    %8 = vector.extract_strided_slice %3 {offsets = [0, 128], sizes = [8, 128], strides = [1, 1]} : vector<8x512xf32> to vector<8x128xf32>
    %c0_8 = arith.constant 0 : index
    %c1 = arith.constant 1 : index
    %c0_9 = arith.constant 0 : index
    %c0_10 = arith.constant 0 : index
    %9 = vector.load %arg5[%c0_8, %c1, %c0_9, %c0_10] : memref<1x4x8x128xf32, #tpu.memory_space<vmem>>, vector<1x1x8x128xf32>
    %10 = vector.shape_cast %9 : vector<1x1x8x128xf32> to vector<8x128xf32>
    %11 = vector.shape_cast %8 : vector<8x128xf32> to vector<1x1x8x128xf32>
    tpu.vector_store %arg5[%c0_8, %c1, %c0_9, %c0_10], %11 {strides = array<i32>} : memref<1x4x8x128xf32, #tpu.memory_space<vmem>>, vector<1x1x8x128xf32>,
    %12 = vector.extract_strided_slice %3 {offsets = [0, 256], sizes = [8, 128], strides = [1, 1]} : vector<8x512xf32> to vector<8x128xf32>
    %c0_11 = arith.constant 0 : index
    %c2 = arith.constant 2 : index
    %c0_12 = arith.constant 0 : index
    %c0_13 = arith.constant 0 : index
    %13 = vector.load %arg5[%c0_11, %c2, %c0_12, %c0_13] : memref<1x4x8x128xf32, #tpu.memory_space<vmem>>, vector<1x1x8x128xf32>
    %14 = vector.shape_cast %13 : vector<1x1x8x128xf32> to vector<8x128xf32>
    %15 = vector.shape_cast %12 : vector<8x128xf32> to vector<1x1x8x128xf32>
    tpu.vector_store %arg5[%c0_11, %c2, %c0_12, %c0_13], %15 {strides = array<i32>} : memref<1x4x8x128xf32, #tpu.memory_space<vmem>>, vector<1x1x8x128xf32>,
    %16 = vector.extract_strided_slice %3 {offsets = [0, 384], sizes = [8, 128], strides = [1, 1]} : vector<8x512xf32> to vector<8x128xf32>
    %c0_14 = arith.constant 0 : index
    %c3 = arith.constant 3 : index
    %c0_15 = arith.constant 0 : index
    %c0_16 = arith.constant 0 : index
    %17 = vector.load %arg5[%c0_14, %c3, %c0_15, %c0_16] : memref<1x4x8x128xf32, #tpu.memory_space<vmem>>, vector<1x1x8x128xf32>
    %18 = vector.shape_cast %17 : vector<1x1x8x128xf32> to vector<8x128xf32>
    %19 = vector.shape_cast %16 : vector<8x128xf32> to vector<1x1x8x128xf32>
    tpu.vector_store %arg5[%c0_14, %c3, %c0_15, %c0_16], %19 {strides = array<i32>} : memref<1x4x8x128xf32, #tpu.memory_space<vmem>>, vector<1x1x8x128xf32>,
    return
  }
  func.func @transform_0(%arg0: i32, %arg1: i32, %arg2: i32) -> (i32, i32, i32) {
    %c0_i32 = arith.constant 0 : i32
    return %arg0, %arg1, %arg2 : i32, i32, i32
  }
  func.func @transform_1(%arg0: i32, %arg1: i32, %arg2: i32) -> (i32, i32) {
    %c0_i32 = arith.constant 0 : i32
    %c0_i32_0 = arith.constant 0 : i32
    %c0_i32_1 = arith.constant 0 : i32
    return %c0_i32, %c0_i32_0 : i32, i32
  }
  func.func @transform_2(%arg0: i32, %arg1: i32, %arg2: i32) -> (i32, i32, i32, i32) {
    %c0_i32 = arith.constant 0 : i32
    %c0_i32_0 = arith.constant 0 : i32
    return %arg0, %c0_i32, %arg1, %arg2 : i32, i32, i32, i32
  }
}

</mosaic_0001>

<llo_original>
// kernel: dwpt_1d.1
$region0: #{dwpt_1d.1}
  #allocation0 [shape = 'u32[]', space=smem, size = 0x4, offset = 0x4, fixed_abs, tag = 'smem constant byte address 0x4 - core index']
  #allocation1 [shape = 'u32[144,128]{1,0:T(1,128)}', space=vmem, size = 0x12000, scoped, tag = 'internal scratch']
  %s0 = inlined_call_operand.vmem [shape: f32[2,8,512], index: 0, kind: input, shape index: {}]
  %s1 = inlined_call_operand.hbm [shape: f32[512,512], index: 1, kind: input, shape index: {}]
  %s2 = inlined_call_operand.vmem [shape: f32[2,4,8,128], index: 2, kind: output, shape index: {}]
  %s3 = sld [smem:[#allocation0]]
  $region45: #{dwpt_1d.1} parent=0
    _
  %s5 = ssub.s32 1, %s3
  %s6 = scalar_select 0, %s5, %s3
  $region1: #{dwpt_1d.1} parent=0
    #allocation2 [shape = 'u8[1048576]{0}', space=vmem, size = 0x100000, scoped, tag = 'input window, operand 1, single buffered']
    #allocation3 [shape = 's32[2]{0}', space=sflag, size = 0x8, scoped, tag = 'scoped memory for dwpt_1d.1']
    %7 = vsyncpa [#allocation3], 0
    loop: start=0, step=1, limit=4
    $region2: #{dwpt_1d.1} parent=1 // loop_pre_header
      _
    $region3: #{dwpt_1d.1} parent=1 // loop_header
      %s9 = sphi 0, %s13
      %p10 = scmp.ge.s32.totalorder %s9, 4
      %s16 = sphi 0, %s35
      %s17 = sphi 0, %s31
      %s18 = sphi 0, %s27
      %s19 = sphi 0, %s16
      %s20 = sphi 0, %s17
      %s21 = sphi 0, %s18
      %s22 = sphi 0, %s19
      %s23 = sphi 0, %s20
      %s24 = sphi 0, %s21
      %s42 = sphi 0, %s44
      %s45 = sphi 0, %s42
      %s46 = sphi 0, %s45
      %s62 = sphi 0, %s46
      %s66 = sphi 0, %s66
      %s68 = sphi 0, %s66
      %s69 = sphi 0, %s68
      %s83 = sphi 0, %s69
      %s93 = sphi 0, %s95
      %s96 = sphi 0, %s93
      %s97 = sphi 0, %s96
      %s113 = sphi 0, %s97
    $region4: #{dwpt_1d.1} parent=1 // loop_header_branch
      %12 = sbr.rel (%p10) target = $region8
    $region5: #{dwpt_1d.1} parent=1 // loop_body
      %s14 = ssub.s32 %s9, 1
      %s15 = ssub.s32 %s9, 2
      %s25 = sadd.s32 1, %s18
      %p26 = scmp.ge.s32.totalorder %s25, 1
      %s27 = scalar_select %p26, 0, %s25
      %s28 = sadd.s32 1, %s17
      %s29 = scalar_select %p26, %s28, %s17
      %p30 = scmp.ge.s32.totalorder %s29, 1
      %s31 = scalar_select %p30, 0, %s29
      %s32 = sadd.s32 1, %s16
      %s33 = scalar_select %p30, %s32, %s16
      %p34 = scmp.ge.s32.totalorder %s33, 2
      %s35 = scalar_select %p34, 0, %s33
      %s36 = ssub.s32 %s16, %s35
      %s37 = ssub.s32 %s17, %s31
      %s38 = sor.u32 %s36, %s37
      %s39 = ssub.s32 %s18, %s27
      %s40 = sor.u32 %s38, %s39
      %p41 = scmp.eq.s32.totalorder %s40, 0
      %s43 = sadd.s32 %s42, 1
      %s44 = scalar_select %p41, %s42, %s43
      %p47 = pneg %p41
      %p48 = scmp.eq.s32.totalorder %s9, 1
      %p49 = por %p47, %p48
      %p50 = scmp.ne.s32.totalorder %s42, %s45
      %p51 = scmp.eq.s32.totalorder %s9, 0
      %p52 = por %p50, %p51
      %p53 = scmp.ne.s32.totalorder %s42, %s45
      %p54 = scmp.eq.s32.totalorder %s14, 1
      %p55 = por %p53, %p54
      %p56 = scmp.ne.s32.totalorder %s45, %s46
      %p57 = scmp.eq.s32.totalorder %s14, 0
      %p58 = por %p56, %p57
      %p59 = scmp.ne.s32.totalorder %s45, %s46
      %p60 = scmp.eq.s32.totalorder %s15, 1
      %p61 = por %p59, %p60
      %p63 = scmp.ne.s32.totalorder %s46, %s62
      %p64 = scmp.eq.s32.totalorder %s15, 0
      %p65 = por %p63, %p64
      %s67 = sadd.s32 %s66, 1
      %p70 = scmp.eq.s32.totalorder %s9, 1
      %p71 = scmp.ne.s32.totalorder %s66, %s68
      %p72 = scmp.eq.s32.totalorder %s9, 0
      %p73 = por %p71, %p72
      %p74 = scmp.ne.s32.totalorder %s66, %s68
      %p75 = scmp.eq.s32.totalorder %s14, 1
      %p76 = por %p74, %p75
      %p77 = scmp.ne.s32.totalorder %s68, %s69
      %p78 = scmp.eq.s32.totalorder %s14, 0
      %p79 = por %p77, %p78
      %p80 = scmp.ne.s32.totalorder %s68, %s69
      %p81 = scmp.eq.s32.totalorder %s15, 1
      %p82 = por %p80, %p81
      %p84 = scmp.ne.s32.totalorder %s69, %s83
      %p85 = scmp.eq.s32.totalorder %s15, 0
      %p86 = por %p84, %p85
      %s87 = ssub.s32 %s16, %s35
      %s88 = ssub.s32 %s17, %s31
      %s89 = sor.u32 %s87, %s88
      %s90 = ssub.s32 %s18, %s27
      %s91 = sor.u32 %s89, %s90
      %p92 = scmp.eq.s32.totalorder %s91, 0
      %s94 = sadd.s32 %s93, 1
      %s95 = scalar_select %p92, %s93, %s94
      %p98 = pneg %p92
      %p99 = scmp.eq.s32.totalorder %s9, 1
      %p100 = por %p98, %p99
      %p101 = scmp.ne.s32.totalorder %s93, %s96
      %p102 = scmp.eq.s32.totalorder %s9, 0
      %p103 = por %p101, %p102
      %p104 = scmp.ne.s32.totalorder %s93, %s96
      %p105 = scmp.eq.s32.totalorder %s14, 1
      %p106 = por %p104, %p105
      %p107 = scmp.ne.s32.totalorder %s96, %s97
      %p108 = scmp.eq.s32.totalorder %s14, 0
      %p109 = por %p107, %p108
      %p110 = scmp.ne.s32.totalorder %s96, %s97
      %p111 = scmp.eq.s32.totalorder %s15, 1
      %p112 = por %p110, %p111
      %p114 = scmp.ne.s32.totalorder %s97, %s113
      %p115 = scmp.eq.s32.totalorder %s15, 0
      %p116 = por %p114, %p115
      %p117 = scmp.le.s32.totalorder 1, %s9
      %p118 = scmp.lt.s32.totalorder %s9, 3
      %p119 = pnand %p117, %p118
      %p120 = pneg %p119
      // Predicated region
      $region9: #{dwpt_1d.1} parent=5 // pred_check
        _
      $region10: #{dwpt_1d.1} parent=5 // pred_check_branch
        %122 = sbr.rel (%p119) target = $region12
      $region11: #{dwpt_1d.1} parent=5 // pred_region
        %s123 = ssub.s32 %s9, 1
        // Predicated region
        $region13: #{dwpt_1d.1} parent=11 // pred_check
          %p124 = pneg %p79
        $region14: #{dwpt_1d.1} parent=11 // pred_check_branch
          %126 = sbr.rel (%p124) target = $region16
        $region15: #{dwpt_1d.1} parent=11 // pred_region
          %s128 = ssub.s32 32768, 32768
          %129 = vsyncadd [#allocation3], %s128
          %s130 = sshll.u32 [#allocation2], 4
          %s131 = int_to_ptr.vmem [resolvable:$true] %s130
          %136 = dma.hbm_to_vmem [thread:$0]  %s1, 32768, %s131, [#allocation3], 512, 512, 32
        $region16: #{dwpt_1d.1} parent=11 // pred_fallthru
          _
      $region12: #{dwpt_1d.1} parent=5 // pred_fallthru
        _
      %p137 = scmp.lt.s32.totalorder %s9, 2
      // Predicated region
      $region17: #{dwpt_1d.1} parent=5 // pred_check
        %p138 = pneg %p137
      $region18: #{dwpt_1d.1} parent=5 // pred_check_branch
        %140 = sbr.rel (%p138) target = $region20
      $region19: #{dwpt_1d.1} parent=5 // pred_region
        // Predicated region
        $region21: #{dwpt_1d.1} parent=19 // pred_check
          %p141 = pneg %p52
        $region22: #{dwpt_1d.1} parent=19 // pred_check_branch
          %143 = sbr.rel (%p141) target = $region24
        $region23: #{dwpt_1d.1} parent=19 // pred_region
          %s144 = smul.u32 4, %s18
          %p145 = scmp.lt.s32.totalorder %s16, 1
          %s146 = scalar_select %p145, %s16, 1
          %p147 = scmp.lt.s32.totalorder %s17, 0
          %s148 = scalar_select %p147, %s17, 0
          %p149 = scmp.lt.s32.totalorder %s144, 3
          %s150 = scalar_select %p149, %s144, 3
          %s151 = smul.addr %s148, 4
          %s152 = sadd.s32 %s150, %s151
          %s153 = smul.addr %s146, 4
          %s154 = sadd.s32 %s152, %s153
          %s155 = smul.addr %s154, 8
          %s156 = scalar_lea.vmem %s0, %s155
          %s157 = smul.u32 4, %s18
        $region24: #{dwpt_1d.1} parent=19 // pred_fallthru
          _
      $region20: #{dwpt_1d.1} parent=5 // pred_fallthru
        _
      %p158 = scmp.le.s32.totalorder 1, %s9
      %p159 = scmp.lt.s32.totalorder %s9, 3
      %p160 = pnand %p158, %p159
      %p161 = pneg %p160
      // Predicated region
      $region25: #{dwpt_1d.1} parent=5 // pred_check
        _
      $region26: #{dwpt_1d.1} parent=5 // pred_check_branch
        %163 = sbr.rel (%p160) target = $region28
      $region27: #{dwpt_1d.1} parent=5 // pred_region
        %s164 = ssub.s32 %s9, 1
        // Predicated region
        $region29: #{dwpt_1d.1} parent=27 // pred_check
          %p165 = pneg %p79
        $region30: #{dwpt_1d.1} parent=27 // pred_check_branch
          %167 = sbr.rel (%p165) target = $region32
        $region31: #{dwpt_1d.1} parent=27 // pred_region
          %168 = dma.done [#allocation3], 32768
        $region32: #{dwpt_1d.1} parent=27 // pred_fallthru
          _
        %s169 = smul.u32 4, %s21
        %p170 = scmp.lt.s32.totalorder %s19, 1
        %s171 = scalar_select %p170, %s19, 1
        %p172 = scmp.lt.s32.totalorder %s20, 0
        %s173 = scalar_select %p172, %s20, 0
        %p174 = scmp.lt.s32.totalorder %s169, 3
        %s175 = scalar_select %p174, %s169, 3
        %s176 = smul.addr %s173, 4
        %s177 = sadd.s32 %s175, %s176
        %s178 = smul.addr %s171, 4
        %s179 = sadd.s32 %s177, %s178
        %s180 = smul.addr %s179, 8
        %s181 = scalar_lea.vmem %s0, %s180
        %p182 = pneg %p58
        %p183 = pneg %p55
        %p184 = pneg %p79
        %p185 = pneg %p76
        %p186 = pneg %p109
        %p187 = pneg %p106
        %p188 = scmp.lt.s32.totalorder %s19, 1
        %s189 = scalar_select %p188, %s19, 1
        %p190 = scmp.lt.s32.totalorder %s20, 0
        %s191 = scalar_select %p190, %s20, 0
        %p192 = scmp.lt.s32.totalorder %s21, 0
        %s193 = scalar_select %p192, %s21, 0
        %s194 = sadd.s32 %s193, %s191
        %s195 = smul.addr %s189, 4
        %s196 = sadd.s32 %s194, %s195
        %s197 = smul.addr %s196, 8
        %s198 = scalar_lea.vmem %s2, %s197
        %s199 = smul.u32 4, %s21
        %p200 = scmp.lt.s32.totalorder %s19, 1
        %s201 = scalar_select %p200, %s19, 1
        %p202 = scmp.lt.s32.totalorder %s20, 0
        %s203 = scalar_select %p202, %s20, 0
        %p204 = scmp.lt.s32.totalorder %s199, 3
        %s205 = scalar_select %p204, %s199, 3
        %s206 = smul.addr %s203, 4
        %s207 = sadd.s32 %s205, %s206
        %s208 = smul.addr %s201, 4
        %s209 = sadd.s32 %s207, %s208
        %s210 = smul.addr %s209, 8
        %s211 = scalar_lea.vmem %s0, %s210
        %s212 = smul.u32 4, %s21
        %p213 = scmp.lt.s32.totalorder %s19, 1
        %s214 = scalar_select %p213, %s19, 1
        %p215 = scmp.lt.s32.totalorder %s20, 0
        %s216 = scalar_select %p215, %s20, 0
        %p217 = scmp.lt.s32.totalorder %s21, 0
        %s218 = scalar_select %p217, %s21, 0
        %s219 = sadd.s32 %s218, %s216
        %s220 = smul.addr %s214, 4
        %s221 = sadd.s32 %s219, %s220
        %s222 = smul.addr %s221, 8
        %s223 = scalar_lea.vmem %s2, %s222
        %v224 = vld [vmem:[%s211] sm:$0xff]
        %v225 = vld [vmem:[%s211 + $0x8] sm:$0xff]
        %v226 = vld [vmem:[%s211 + $0x10] sm:$0xff]
        %v227 = vld [vmem:[%s211 + $0x18] sm:$0xff]
        %v228 = vld [vmem:[#allocation2] sm:$0xff]
        %v229 = vld [vmem:[#allocation2 + $0x8] sm:$0xff]
        %v230 = vld [vmem:[#allocation2 + $0x10] sm:$0xff]
        %v231 = vld [vmem:[#allocation2 + $0x18] sm:$0xff]
        %v232 = vld [vmem:[#allocation2 + $0x20] sm:$0xff]
        %v233 = vld [vmem:[#allocation2 + $0x28] sm:$0xff]
        %v234 = vld [vmem:[#allocation2 + $0x30] sm:$0xff]
        %v235 = vld [vmem:[#allocation2 + $0x38] sm:$0xff]
        %v236 = vld [vmem:[#allocation2 + $0x40] sm:$0xff]
        %v237 = vld [vmem:[#allocation2 + $0x48] sm:$0xff]
        %v238 = vld [vmem:[#allocation2 + $0x50] sm:$0xff]
        %v239 = vld [vmem:[#allocation2 + $0x58] sm:$0xff]
        %v240 = vld [vmem:[#allocation2 + $0x60] sm:$0xff]
        %v241 = vld [vmem:[#allocation2 + $0x68] sm:$0xff]
        %v242 = vld [vmem:[#allocation2 + $0x70] sm:$0xff]
        %v243 = vld [vmem:[#allocation2 + $0x78] sm:$0xff]
        %v244 = vld [vmem:[#allocation2 + $0x80] sm:$0xff]
        %v245 = vld [vmem:[#allocation2 + $0x88] sm:$0xff]
        %v246 = vld [vmem:[#allocation2 + $0x90] sm:$0xff]
        %v247 = vld [vmem:[#allocation2 + $0x98] sm:$0xff]
        %v248 = vld [vmem:[#allocation2 + $0xa0] sm:$0xff]
        %v249 = vld [vmem:[#allocation2 + $0xa8] sm:$0xff]
        %v250 = vld [vmem:[#allocation2 + $0xb0] sm:$0xff]
        %v251 = vld [vmem:[#allocation2 + $0xb8] sm:$0xff]
        %v252 = vld [vmem:[#allocation2 + $0xc0] sm:$0xff]
        %v253 = vld [vmem:[#allocation2 + $0xc8] sm:$0xff]
        %v254 = vld [vmem:[#allocation2 + $0xd0] sm:$0xff]
        %v255 = vld [vmem:[#allocation2 + $0xd8] sm:$0xff]
        %v256 = vld [vmem:[#allocation2 + $0xe0] sm:$0xff]
        %v257 = vld [vmem:[#allocation2 + $0xe8] sm:$0xff]
        %v258 = vld [vmem:[#allocation2 + $0xf0] sm:$0xff]
        %v259 = vld [vmem:[#allocation2 + $0xf8] sm:$0xff]
        %v260 = vld [vmem:[#allocation2 + $0x100] sm:$0xff]
        %v261 = vld [vmem:[#allocation2 + $0x108] sm:$0xff]
        %v262 = vld [vmem:[#allocation2 + $0x110] sm:$0xff]
        %v263 = vld [vmem:[#allocation2 + $0x118] sm:$0xff]
        %v264 = vld [vmem:[#allocation2 + $0x120] sm:$0xff]
        %v265 = vld [vmem:[#allocation2 + $0x128] sm:$0xff]
        %v266 = vld [vmem:[#allocation2 + $0x130] sm:$0xff]
        %v267 = vld [vmem:[#allocation2 + $0x138] sm:$0xff]
        %v268 = vld [vmem:[#allocation2 + $0x140] sm:$0xff]
        %v269 = vld [vmem:[#allocation2 + $0x148] sm:$0xff]
        %v270 = vld [vmem:[#allocation2 + $0x150] sm:$0xff]
        %v271 = vld [vmem:[#allocation2 + $0x158] sm:$0xff]
        %v272 = vld [vmem:[#allocation2 + $0x160] sm:$0xff]
        %v273 = vld [vmem:[#allocation2 + $0x168] sm:$0xff]
        %v274 = vld [vmem:[#allocation2 + $0x170] sm:$0xff]
        %v275 = vld [vmem:[#allocation2 + $0x178] sm:$0xff]
        %v276 = vld [vmem:[#allocation2 + $0x180] sm:$0xff]
        %v277 = vld [vmem:[#allocation2 + $0x188] sm:$0xff]
        %v278 = vld [vmem:[#allocation2 + $0x190] sm:$0xff]
        %v279 = vld [vmem:[#allocation2 + $0x198] sm:$0xff]
        %v280 = vld [vmem:[#allocation2 + $0x1a0] sm:$0xff]
        %v281 = vld [vmem:[#allocation2 + $0x1a8] sm:$0xff]
        %v282 = vld [vmem:[#allocation2 + $0x1b0] sm:$0xff]
        %v283 = vld [vmem:[#allocation2 + $0x1b8] sm:$0xff]
        %v284 = vld [vmem:[#allocation2 + $0x1c0] sm:$0xff]
        %v285 = vld [vmem:[#allocation2 + $0x1c8] sm:$0xff]
        %v286 = vld [vmem:[#allocation2 + $0x1d0] sm:$0xff]
        %v287 = vld [vmem:[#allocation2 + $0x1d8] sm:$0xff]
        %v288 = vld [vmem:[#allocation2 + $0x1e0] sm:$0xff]
        %v289 = vld [vmem:[#allocation2 + $0x1e8] sm:$0xff]
        %v290 = vld [vmem:[#allocation2 + $0x1f0] sm:$0xff]
        %v291 = vld [vmem:[#allocation2 + $0x1f8] sm:$0xff]
        %v292 = vld [vmem:[#allocation2 + $0x200] sm:$0xff]
        %v293 = vld [vmem:[#allocation2 + $0x208] sm:$0xff]
        %v294 = vld [vmem:[#allocation2 + $0x210] sm:$0xff]
        %v295 = vld [vmem:[#allocation2 + $0x218] sm:$0xff]
        %v296 = vld [vmem:[#allocation2 + $0x220] sm:$0xff]
        %v297 = vld [vmem:[#allocation2 + $0x228] sm:$0xff]
        %v298 = vld [vmem:[#allocation2 + $0x230] sm:$0xff]
        %v299 = vld [vmem:[#allocation2 + $0x238] sm:$0xff]
        %v300 = vld [vmem:[#allocation2 + $0x240] sm:$0xff]
        %v301 = vld [vmem:[#allocation2 + $0x248] sm:$0xff]
        %v302 = vld [vmem:[#allocation2 + $0x250] sm:$0xff]
        %v303 = vld [vmem:[#allocation2 + $0x258] sm:$0xff]
        %v304 = vld [vmem:[#allocation2 + $0x260] sm:$0xff]
        %v305 = vld [vmem:[#allocation2 + $0x268] sm:$0xff]
        %v306 = vld [vmem:[#allocation2 + $0x270] sm:$0xff]
        %v307 = vld [vmem:[#allocation2 + $0x278] sm:$0xff]
        %v308 = vld [vmem:[#allocation2 + $0x280] sm:$0xff]
        %v309 = vld [vmem:[#allocation2 + $0x288] sm:$0xff]
        %v310 = vld [vmem:[#allocation2 + $0x290] sm:$0xff]
        %v311 = vld [vmem:[#allocation2 + $0x298] sm:$0xff]
        %v312 = vld [vmem:[#allocation2 + $0x2a0] sm:$0xff]
        %v313 = vld [vmem:[#allocation2 + $0x2a8] sm:$0xff]
        %v314 = vld [vmem:[#allocation2 + $0x2b0] sm:$0xff]
        %v315 = vld [vmem:[#allocation2 + $0x2b8] sm:$0xff]
        %v316 = vld [vmem:[#allocation2 + $0x2c0] sm:$0xff]
        %v317 = vld [vmem:[#allocation2 + $0x2c8] sm:$0xff]
        %v318 = vld [vmem:[#allocation2 + $0x2d0] sm:$0xff]
        %v319 = vld [vmem:[#allocation2 + $0x2d8] sm:$0xff]
        %v320 = vld [vmem:[#allocation2 + $0x2e0] sm:$0xff]
        %v321 = vld [vmem:[#allocation2 + $0x2e8] sm:$0xff]
        %v322 = vld [vmem:[#allocation2 + $0x2f0] sm:$0xff]
        %v323 = vld [vmem:[#allocation2 + $0x2f8] sm:$0xff]
        %v324 = vld [vmem:[#allocation2 + $0x300] sm:$0xff]
        %v325 = vld [vmem:[#allocation2 + $0x308] sm:$0xff]
        %v326 = vld [vmem:[#allocation2 + $0x310] sm:$0xff]
        %v327 = vld [vmem:[#allocation2 + $0x318] sm:$0xff]
        %v328 = vld [vmem:[#allocation2 + $0x320] sm:$0xff]
        %v329 = vld [vmem:[#allocation2 + $0x328] sm:$0xff]
        %v330 = vld [vmem:[#allocation2 + $0x330] sm:$0xff]
        %v331 = vld [vmem:[#allocation2 + $0x338] sm:$0xff]
        %v332 = vld [vmem:[#allocation2 + $0x340] sm:$0xff]
        %v333 = vld [vmem:[#allocation2 + $0x348] sm:$0xff]
        %v334 = vld [vmem:[#allocation2 + $0x350] sm:$0xff]
        %v335 = vld [vmem:[#allocation2 + $0x358] sm:$0xff]
        %v336 = vld [vmem:[#allocation2 + $0x360] sm:$0xff]
        %v337 = vld [vmem:[#allocation2 + $0x368] sm:$0xff]
        %v338 = vld [vmem:[#allocation2 + $0x370] sm:$0xff]
        %v339 = vld [vmem:[#allocation2 + $0x378] sm:$0xff]
        %v340 = vld [vmem:[#allocation2 + $0x380] sm:$0xff]
        %v341 = vld [vmem:[#allocation2 + $0x388] sm:$0xff]
        %v342 = vld [vmem:[#allocation2 + $0x390] sm:$0xff]
        %v343 = vld [vmem:[#allocation2 + $0x398] sm:$0xff]
        %v344 = vld [vmem:[#allocation2 + $0x3a0] sm:$0xff]
        %v345 = vld [vmem:[#allocation2 + $0x3a8] sm:$0xff]
        %v346 = vld [vmem:[#allocation2 + $0x3b0] sm:$0xff]
        %v347 = vld [vmem:[#allocation2 + $0x3b8] sm:$0xff]
        %v348 = vld [vmem:[#allocation2 + $0x3c0] sm:$0xff]
        %v349 = vld [vmem:[#allocation2 + $0x3c8] sm:$0xff]
        %v350 = vld [vmem:[#allocation2 + $0x3d0] sm:$0xff]
        %v351 = vld [vmem:[#allocation2 + $0x3d8] sm:$0xff]
        %v352 = vld [vmem:[#allocation2 + $0x3e0] sm:$0xff]
        %v353 = vld [vmem:[#allocation2 + $0x3e8] sm:$0xff]
        %v354 = vld [vmem:[#allocation2 + $0x3f0] sm:$0xff]
        %v355 = vld [vmem:[#allocation2 + $0x3f8] sm:$0xff]
        %v356 = vld [vmem:[#allocation2 + $0x400] sm:$0xff]
        %v357 = vld [vmem:[#allocation2 + $0x408] sm:$0xff]
        %v358 = vld [vmem:[#allocation2 + $0x410] sm:$0xff]
        %v359 = vld [vmem:[#allocation2 + $0x418] sm:$0xff]
        %v360 = vld [vmem:[#allocation2 + $0x420] sm:$0xff]
        %v361 = vld [vmem:[#allocation2 + $0x428] sm:$0xff]
        %v362 = vld [vmem:[#allocation2 + $0x430] sm:$0xff]
        %v363 = vld [vmem:[#allocation2 + $0x438] sm:$0xff]
        %v364 = vld [vmem:[#allocation2 + $0x440] sm:$0xff]
        %v365 = vld [vmem:[#allocation2 + $0x448] sm:$0xff]
        %v366 = vld [vmem:[#allocation2 + $0x450] sm:$0xff]
        %v367 = vld [vmem:[#allocation2 + $0x458] sm:$0xff]
        %v368 = vld [vmem:[#allocation2 + $0x460] sm:$0xff]
        %v369 = vld [vmem:[#allocation2 + $0x468] sm:$0xff]
        %v370 = vld [vmem:[#allocation2 + $0x470] sm:$0xff]
        %v371 = vld [vmem:[#allocation2 + $0x478] sm:$0xff]
        %v372 = vld [vmem:[#allocation2 + $0x480] sm:$0xff]
        %v373 = vld [vmem:[#allocation2 + $0x488] sm:$0xff]
        %v374 = vld [vmem:[#allocation2 + $0x490] sm:$0xff]
        %v375 = vld [vmem:[#allocation2 + $0x498] sm:$0xff]
        %v376 = vld [vmem:[#allocation2 + $0x4a0] sm:$0xff]
        %v377 = vld [vmem:[#allocation2 + $0x4a8] sm:$0xff]
        %v378 = vld [vmem:[#allocation2 + $0x4b0] sm:$0xff]
        %v379 = vld [vmem:[#allocation2 + $0x4b8] sm:$0xff]
        %v380 = vld [vmem:[#allocation2 + $0x4c0] sm:$0xff]
        %v381 = vld [vmem:[#allocation2 + $0x4c8] sm:$0xff]
        %v382 = vld [vmem:[#allocation2 + $0x4d0] sm:$0xff]
        %v383 = vld [vmem:[#allocation2 + $0x4d8] sm:$0xff]
        %v384 = vld [vmem:[#allocation2 + $0x4e0] sm:$0xff]
        %v385 = vld [vmem:[#allocation2 + $0x4e8] sm:$0xff]
        %v386 = vld [vmem:[#allocation2 + $0x4f0] sm:$0xff]
        %v387 = vld [vmem:[#allocation2 + $0x4f8] sm:$0xff]
        %v388 = vld [vmem:[#allocation2 + $0x500] sm:$0xff]
        %v389 = vld [vmem:[#allocation2 + $0x508] sm:$0xff]
        %v390 = vld [vmem:[#allocation2 + $0x510] sm:$0xff]
        %v391 = vld [vmem:[#allocation2 + $0x518] sm:$0xff]
        %v392 = vld [vmem:[#allocation2 + $0x520] sm:$0xff]
        %v393 = vld [vmem:[#allocation2 + $0x528] sm:$0xff]
        %v394 = vld [vmem:[#allocation2 + $0x530] sm:$0xff]
        %v395 = vld [vmem:[#allocation2 + $0x538] sm:$0xff]
        %v396 = vld [vmem:[#allocation2 + $0x540] sm:$0xff]
        %v397 = vld [vmem:[#allocation2 + $0x548] sm:$0xff]
        %v398 = vld [vmem:[#allocation2 + $0x550] sm:$0xff]
        %v399 = vld [vmem:[#allocation2 + $0x558] sm:$0xff]
        %v400 = vld [vmem:[#allocation2 + $0x560] sm:$0xff]
        %v401 = vld [vmem:[#allocation2 + $0x568] sm:$0xff]
        %v402 = vld [vmem:[#allocation2 + $0x570] sm:$0xff]
        %v403 = vld [vmem:[#allocation2 + $0x578] sm:$0xff]
        %v404 = vld [vmem:[#allocation2 + $0x580] sm:$0xff]
        %v405 = vld [vmem:[#allocation2 + $0x588] sm:$0xff]
        %v406 = vld [vmem:[#allocation2 + $0x590] sm:$0xff]
        %v407 = vld [vmem:[#allocation2 + $0x598] sm:$0xff]
        %v408 = vld [vmem:[#allocation2 + $0x5a0] sm:$0xff]
        %v409 = vld [vmem:[#allocation2 + $0x5a8] sm:$0xff]
        %v410 = vld [vmem:[#allocation2 + $0x5b0] sm:$0xff]
        %v411 = vld [vmem:[#allocation2 + $0x5b8] sm:$0xff]
        %v412 = vld [vmem:[#allocation2 + $0x5c0] sm:$0xff]
        %v413 = vld [vmem:[#allocation2 + $0x5c8] sm:$0xff]
        %v414 = vld [vmem:[#allocation2 + $0x5d0] sm:$0xff]
        %v415 = vld [vmem:[#allocation2 + $0x5d8] sm:$0xff]
        %v416 = vld [vmem:[#allocation2 + $0x5e0] sm:$0xff]
        %v417 = vld [vmem:[#allocation2 + $0x5e8] sm:$0xff]
        %v418 = vld [vmem:[#allocation2 + $0x5f0] sm:$0xff]
        %v419 = vld [vmem:[#allocation2 + $0x5f8] sm:$0xff]
        %v420 = vld [vmem:[#allocation2 + $0x600] sm:$0xff]
        %v421 = vld [vmem:[#allocation2 + $0x608] sm:$0xff]
        %v422 = vld [vmem:[#allocation2 + $0x610] sm:$0xff]
        %v423 = vld [vmem:[#allocation2 + $0x618] sm:$0xff]
        %v424 = vld [vmem:[#allocation2 + $0x620] sm:$0xff]
        %v425 = vld [vmem:[#allocation2 + $0x628] sm:$0xff]
        %v426 = vld [vmem:[#allocation2 + $0x630] sm:$0xff]
        %v427 = vld [vmem:[#allocation2 + $0x638] sm:$0xff]
        %v428 = vld [vmem:[#allocation2 + $0x640] sm:$0xff]
        %v429 = vld [vmem:[#allocation2 + $0x648] sm:$0xff]
        %v430 = vld [vmem:[#allocation2 + $0x650] sm:$0xff]
        %v431 = vld [vmem:[#allocation2 + $0x658] sm:$0xff]
        %v432 = vld [vmem:[#allocation2 + $0x660] sm:$0xff]
        %v433 = vld [vmem:[#allocation2 + $0x668] sm:$0xff]
        %v434 = vld [vmem:[#allocation2 + $0x670] sm:$0xff]
        %v435 = vld [vmem:[#allocation2 + $0x678] sm:$0xff]
        %v436 = vld [vmem:[#allocation2 + $0x680] sm:$0xff]
        %v437 = vld [vmem:[#allocation2 + $0x688] sm:$0xff]
        %v438 = vld [vmem:[#allocation2 + $0x690] sm:$0xff]
        %v439 = vld [vmem:[#allocation2 + $0x698] sm:$0xff]
        %v440 = vld [vmem:[#allocation2 + $0x6a0] sm:$0xff]
        %v441 = vld [vmem:[#allocation2 + $0x6a8] sm:$0xff]
        %v442 = vld [vmem:[#allocation2 + $0x6b0] sm:$0xff]
        %v443 = vld [vmem:[#allocation2 + $0x6b8] sm:$0xff]
        %v444 = vld [vmem:[#allocation2 + $0x6c0] sm:$0xff]
        %v445 = vld [vmem:[#allocation2 + $0x6c8] sm:$0xff]
        %v446 = vld [vmem:[#allocation2 + $0x6d0] sm:$0xff]
        %v447 = vld [vmem:[#allocation2 + $0x6d8] sm:$0xff]
        %v448 = vld [vmem:[#allocation2 + $0x6e0] sm:$0xff]
        %v449 = vld [vmem:[#allocation2 + $0x6e8] sm:$0xff]
        %v450 = vld [vmem:[#allocation2 + $0x6f0] sm:$0xff]
        %v451 = vld [vmem:[#allocation2 + $0x6f8] sm:$0xff]
        %v452 = vld [vmem:[#allocation2 + $0x700] sm:$0xff]
        %v453 = vld [vmem:[#allocation2 + $0x708] sm:$0xff]
        %v454 = vld [vmem:[#allocation2 + $0x710] sm:$0xff]
        %v455 = vld [vmem:[#allocation2 + $0x718] sm:$0xff]
        %v456 = vld [vmem:[#allocation2 + $0x720] sm:$0xff]
        %v457 = vld [vmem:[#allocation2 + $0x728] sm:$0xff]
        %v458 = vld [vmem:[#allocation2 + $0x730] sm:$0xff]
        %v459 = vld [vmem:[#allocation2 + $0x738] sm:$0xff]
        %v460 = vld [vmem:[#allocation2 + $0x740] sm:$0xff]
        %v461 = vld [vmem:[#allocation2 + $0x748] sm:$0xff]
        %v462 = vld [vmem:[#allocation2 + $0x750] sm:$0xff]
        %v463 = vld [vmem:[#allocation2 + $0x758] sm:$0xff]
        %v464 = vld [vmem:[#allocation2 + $0x760] sm:$0xff]
        %v465 = vld [vmem:[#allocation2 + $0x768] sm:$0xff]
        %v466 = vld [vmem:[#allocation2 + $0x770] sm:$0xff]
        %v467 = vld [vmem:[#allocation2 + $0x778] sm:$0xff]
        %v468 = vld [vmem:[#allocation2 + $0x780] sm:$0xff]
        %v469 = vld [vmem:[#allocation2 + $0x788] sm:$0xff]
        %v470 = vld [vmem:[#allocation2 + $0x790] sm:$0xff]
        %v471 = vld [vmem:[#allocation2 + $0x798] sm:$0xff]
        %v472 = vld [vmem:[#allocation2 + $0x7a0] sm:$0xff]
        %v473 = vld [vmem:[#allocation2 + $0x7a8] sm:$0xff]
        %v474 = vld [vmem:[#allocation2 + $0x7b0] sm:$0xff]
        %v475 = vld [vmem:[#allocation2 + $0x7b8] sm:$0xff]
        %v476 = vld [vmem:[#allocation2 + $0x7c0] sm:$0xff]
        %v477 = vld [vmem:[#allocation2 + $0x7c8] sm:$0xff]
        %v478 = vld [vmem:[#allocation2 + $0x7d0] sm:$0xff]
        %v479 = vld [vmem:[#allocation2 + $0x7d8] sm:$0xff]
        %v480 = vld [vmem:[#allocation2 + $0x7e0] sm:$0xff]
        %v481 = vld [vmem:[#allocation2 + $0x7e8] sm:$0xff]
        %v482 = vld [vmem:[#allocation2 + $0x7f0] sm:$0xff]
        %v483 = vld [vmem:[#allocation2 + $0x7f8] sm:$0xff]
        %484 = vmatprep.subr.mxu0 %v229
        %485 = vmatpush1.msra.mxu0 %v228
        %486 = vmatprep.subr.mxu0 %v233
        %487 = vmatpush1.msra.mxu0 %v232
        %488 = vmatprep.subr.mxu0 %v237
        %489 = vmatpush1.msra.mxu0 %v236
        %490 = vmatprep.subr.mxu0 %v241
        %491 = vmatpush1.msra.mxu0 %v240
        %492 = vmatprep.subr.mxu0 %v245
        %493 = vmatpush1.msra.mxu0 %v244
        %494 = vmatprep.subr.mxu0 %v249
        %495 = vmatpush1.msra.mxu0 %v248
        %496 = vmatprep.subr.mxu0 %v253
        %497 = vmatpush1.msra.mxu0 %v252
        %498 = vmatprep.subr.mxu0 %v257
        %499 = vmatpush1.msra.mxu0 %v256
        %500 = vmatprep.subr.mxu0 %v261
        %501 = vmatpush1.msra.mxu0 %v260
        %502 = vmatprep.subr.mxu0 %v265
        %503 = vmatpush1.msra.mxu0 %v264
        %504 = vmatprep.subr.mxu0 %v269
        %505 = vmatpush1.msra.mxu0 %v268
        %506 = vmatprep.subr.mxu0 %v273
        %507 = vmatpush1.msra.mxu0 %v272
        %508 = vmatprep.subr.mxu0 %v277
        %509 = vmatpush1.msra.mxu0 %v276
        %510 = vmatprep.subr.mxu0 %v281
        %511 = vmatpush1.msra.mxu0 %v280
        %512 = vmatprep.subr.mxu0 %v285
        %513 = vmatpush1.msra.mxu0 %v284
        %514 = vmatprep.subr.mxu0 %v289
        %515 = vmatpush1.msra.mxu0 %v288
        %516 = vmatprep.subr.mxu0 %v293
        %517 = vmatpush1.msra.mxu0 %v292
        %518 = vmatprep.subr.mxu0 %v297
        %519 = vmatpush1.msra.mxu0 %v296
        %520 = vmatprep.subr.mxu0 %v301
        %521 = vmatpush1.msra.mxu0 %v300
        %522 = vmatprep.subr.mxu0 %v305
        %523 = vmatpush1.msra.mxu0 %v304
        %524 = vmatprep.subr.mxu0 %v309
        %525 = vmatpush1.msra.mxu0 %v308
        %526 = vmatprep.subr.mxu0 %v313
        %527 = vmatpush1.msra.mxu0 %v312
        %528 = vmatprep.subr.mxu0 %v317
        %529 = vmatpush1.msra.mxu0 %v316
        %530 = vmatprep.subr.mxu0 %v321
        %531 = vmatpush1.msra.mxu0 %v320
        %532 = vmatprep.subr.mxu0 %v325
        %533 = vmatpush1.msra.mxu0 %v324
        %534 = vmatprep.subr.mxu0 %v329
        %535 = vmatpush1.msra.mxu0 %v328
        %536 = vmatprep.subr.mxu0 %v333
        %537 = vmatpush1.msra.mxu0 %v332
        %538 = vmatprep.subr.mxu0 %v337
        %539 = vmatpush1.msra.mxu0 %v336
        %540 = vmatprep.subr.mxu0 %v341
        %541 = vmatpush1.msra.mxu0 %v340
        %542 = vmatprep.subr.mxu0 %v345
        %543 = vmatpush1.msra.mxu0 %v344
        %544 = vmatprep.subr.mxu0 %v349
        %545 = vmatpush1.msra.mxu0 %v348
        %546 = vmatprep.subr.mxu0 %v353
        %547 = vmatpush1.msra.mxu0 %v352
        %548 = vmatprep.mubr.f32.mxu0 %v225
        %549 = vmatmul.mubr.f32.gmra.mrb[0].mxu0 %v224
        %v550 = vpop.f32.mrb[0].mxu0
        %v551 = vadd.f32 0.0, %v550
        %v552 = vpop.f32.mrb[0].mxu0
        %v553 = vadd.f32 0.0, %v552
        %554 = vdwg.mxu0
        %555 = vmatprep.subr.mxu0 %v357
        %556 = vmatpush1.msra.mxu0 %v356
        %557 = vmatprep.subr.mxu0 %v361
        %558 = vmatpush1.msra.mxu0 %v360
        %559 = vmatprep.subr.mxu0 %v365
        %560 = vmatpush1.msra.mxu0 %v364
        %561 = vmatprep.subr.mxu0 %v369
        %562 = vmatpush1.msra.mxu0 %v368
        %563 = vmatprep.subr.mxu0 %v373
        %564 = vmatpush1.msra.mxu0 %v372
        %565 = vmatprep.subr.mxu0 %v377
        %566 = vmatpush1.msra.mxu0 %v376
        %567 = vmatprep.subr.mxu0 %v381
        %568 = vmatpush1.msra.mxu0 %v380
        %569 = vmatprep.subr.mxu0 %v385
        %570 = vmatpush1.msra.mxu0 %v384
        %571 = vmatprep.subr.mxu0 %v389
        %572 = vmatpush1.msra.mxu0 %v388
        %573 = vmatprep.subr.mxu0 %v393
        %574 = vmatpush1.msra.mxu0 %v392
        %575 = vmatprep.subr.mxu0 %v397
        %576 = vmatpush1.msra.mxu0 %v396
        %577 = vmatprep.subr.mxu0 %v401
        %578 = vmatpush1.msra.mxu0 %v400
        %579 = vmatprep.subr.mxu0 %v405
        %580 = vmatpush1.msra.mxu0 %v404
        %581 = vmatprep.subr.mxu0 %v409
        %582 = vmatpush1.msra.mxu0 %v408
        %583 = vmatprep.subr.mxu0 %v413
        %584 = vmatpush1.msra.mxu0 %v412
        %585 = vmatprep.subr.mxu0 %v417
        %586 = vmatpush1.msra.mxu0 %v416
        %587 = vmatprep.subr.mxu0 %v421
        %588 = vmatpush1.msra.mxu0 %v420
        %589 = vmatprep.subr.mxu0 %v425
        %590 = vmatpush1.msra.mxu0 %v424
        %591 = vmatprep.subr.mxu0 %v429
        %592 = vmatpush1.msra.mxu0 %v428
        %593 = vmatprep.subr.mxu0 %v433
        %594 = vmatpush1.msra.mxu0 %v432
        %595 = vmatprep.subr.mxu0 %v437
        %596 = vmatpush1.msra.mxu0 %v436
        %597 = vmatprep.subr.mxu0 %v441
        %598 = vmatpush1.msra.mxu0 %v440
        %599 = vmatprep.subr.mxu0 %v445
        %600 = vmatpush1.msra.mxu0 %v444
        %601 = vmatprep.subr.mxu0 %v449
        %602 = vmatpush1.msra.mxu0 %v448
        %603 = vmatprep.subr.mxu0 %v453
        %604 = vmatpush1.msra.mxu0 %v452
        %605 = vmatprep.subr.mxu0 %v457
        %606 = vmatpush1.msra.mxu0 %v456
        %607 = vmatprep.subr.mxu0 %v461
        %608 = vmatpush1.msra.mxu0 %v460
        %609 = vmatprep.subr.mxu0 %v465
        %610 = vmatpush1.msra.mxu0 %v464
        %611 = vmatprep.subr.mxu0 %v469
        %612 = vmatpush1.msra.mxu0 %v468
        %613 = vmatprep.subr.mxu0 %v473
        %614 = vmatpush1.msra.mxu0 %v472
        %615 = vmatprep.subr.mxu0 %v477
        %616 = vmatpush1.msra.mxu0 %v476
        %617 = vmatprep.subr.mxu0 %v481
        %618 = vmatpush1.msra.mxu0 %v480
        %619 = vmatprep.mubr.f32.mxu0 %v227
        %620 = vmatmul.mubr.f32.gmra.mrb[0].mxu0 %v226
        %v621 = vpop.f32.mrb[0].mxu0
        %v622 = vadd.f32 %v551, %v621
        %v623 = vpop.f32.mrb[0].mxu0
        %v624 = vadd.f32 %v553, %v623
        %625 = vdwg.mxu0
        %626 = vmatprep.subr.mxu0 %v231
        %627 = vmatpush1.msra.mxu0 %v230
        %628 = vmatprep.subr.mxu0 %v235
        %629 = vmatpush1.msra.mxu0 %v234
        %630 = vmatprep.subr.mxu0 %v239
        %631 = vmatpush1.msra.mxu0 %v238
        %632 = vmatprep.subr.mxu0 %v243
        %633 = vmatpush1.msra.mxu0 %v242
        %634 = vmatprep.subr.mxu0 %v247
        %635 = vmatpush1.msra.mxu0 %v246
        %636 = vmatprep.subr.mxu0 %v251
        %637 = vmatpush1.msra.mxu0 %v250
        %638 = vmatprep.subr.mxu0 %v255
        %639 = vmatpush1.msra.mxu0 %v254
        %640 = vmatprep.subr.mxu0 %v259
        %641 = vmatpush1.msra.mxu0 %v258
        %642 = vmatprep.subr.mxu0 %v263
        %643 = vmatpush1.msra.mxu0 %v262
        %644 = vmatprep.subr.mxu0 %v267
        %645 = vmatpush1.msra.mxu0 %v266
        %646 = vmatprep.subr.mxu0 %v271
        %647 = vmatpush1.msra.mxu0 %v270
        %648 = vmatprep.subr.mxu0 %v275
        %649 = vmatpush1.msra.mxu0 %v274
        %650 = vmatprep.subr.mxu0 %v279
        %651 = vmatpush1.msra.mxu0 %v278
        %652 = vmatprep.subr.mxu0 %v283
        %653 = vmatpush1.msra.mxu0 %v282
        %654 = vmatprep.subr.mxu0 %v287
        %655 = vmatpush1.msra.mxu0 %v286
        %656 = vmatprep.subr.mxu0 %v291
        %657 = vmatpush1.msra.mxu0 %v290
        %658 = vmatprep.subr.mxu0 %v295
        %659 = vmatpush1.msra.mxu0 %v294
        %660 = vmatprep.subr.mxu0 %v299
        %661 = vmatpush1.msra.mxu0 %v298
        %662 = vmatprep.subr.mxu0 %v303
        %663 = vmatpush1.msra.mxu0 %v302
        %664 = vmatprep.subr.mxu0 %v307
        %665 = vmatpush1.msra.mxu0 %v306
        %666 = vmatprep.subr.mxu0 %v311
        %667 = vmatpush1.msra.mxu0 %v310
        %668 = vmatprep.subr.mxu0 %v315
        %669 = vmatpush1.msra.mxu0 %v314
        %670 = vmatprep.subr.mxu0 %v319
        %671 = vmatpush1.msra.mxu0 %v318
        %672 = vmatprep.subr.mxu0 %v323
        %673 = vmatpush1.msra.mxu0 %v322
        %674 = vmatprep.subr.mxu0 %v327
        %675 = vmatpush1.msra.mxu0 %v326
        %676 = vmatprep.subr.mxu0 %v331
        %677 = vmatpush1.msra.mxu0 %v330
        %678 = vmatprep.subr.mxu0 %v335
        %679 = vmatpush1.msra.mxu0 %v334
        %680 = vmatprep.subr.mxu0 %v339
        %681 = vmatpush1.msra.mxu0 %v338
        %682 = vmatprep.subr.mxu0 %v343
        %683 = vmatpush1.msra.mxu0 %v342
        %684 = vmatprep.subr.mxu0 %v347
        %685 = vmatpush1.msra.mxu0 %v346
        %686 = vmatprep.subr.mxu0 %v351
        %687 = vmatpush1.msra.mxu0 %v350
        %688 = vmatprep.subr.mxu0 %v355
        %689 = vmatpush1.msra.mxu0 %v354
        %690 = vmatprep.mubr.f32.mxu0 %v225
        %691 = vmatmul.mubr.f32.gmra.mrb[0].mxu0 %v224
        %v692 = vpop.f32.mrb[0].mxu0
        %v693 = vadd.f32 0.0, %v692
        %v694 = vpop.f32.mrb[0].mxu0
        %v695 = vadd.f32 0.0, %v694
        %696 = vdwg.mxu0
        %697 = vmatprep.subr.mxu0 %v359
        %698 = vmatpush1.msra.mxu0 %v358
        %699 = vmatprep.subr.mxu0 %v363
        %700 = vmatpush1.msra.mxu0 %v362
        %701 = vmatprep.subr.mxu0 %v367
        %702 = vmatpush1.msra.mxu0 %v366
        %703 = vmatprep.subr.mxu0 %v371
        %704 = vmatpush1.msra.mxu0 %v370
        %705 = vmatprep.subr.mxu0 %v375
        %706 = vmatpush1.msra.mxu0 %v374
        %707 = vmatprep.subr.mxu0 %v379
        %708 = vmatpush1.msra.mxu0 %v378
        %709 = vmatprep.subr.mxu0 %v383
        %710 = vmatpush1.msra.mxu0 %v382
        %711 = vmatprep.subr.mxu0 %v387
        %712 = vmatpush1.msra.mxu0 %v386
        %713 = vmatprep.subr.mxu0 %v391
        %714 = vmatpush1.msra.mxu0 %v390
        %715 = vmatprep.subr.mxu0 %v395
        %716 = vmatpush1.msra.mxu0 %v394
        %717 = vmatprep.subr.mxu0 %v399
        %718 = vmatpush1.msra.mxu0 %v398
        %719 = vmatprep.subr.mxu0 %v403
        %720 = vmatpush1.msra.mxu0 %v402
        %721 = vmatprep.subr.mxu0 %v407
        %722 = vmatpush1.msra.mxu0 %v406
        %723 = vmatprep.subr.mxu0 %v411
        %724 = vmatpush1.msra.mxu0 %v410
        %725 = vmatprep.subr.mxu0 %v415
        %726 = vmatpush1.msra.mxu0 %v414
        %727 = vmatprep.subr.mxu0 %v419
        %728 = vmatpush1.msra.mxu0 %v418
        %729 = vmatprep.subr.mxu0 %v423
        %730 = vmatpush1.msra.mxu0 %v422
        %731 = vmatprep.subr.mxu0 %v427
        %732 = vmatpush1.msra.mxu0 %v426
        %733 = vmatprep.subr.mxu0 %v431
        %734 = vmatpush1.msra.mxu0 %v430
        %735 = vmatprep.subr.mxu0 %v435
        %736 = vmatpush1.msra.mxu0 %v434
        %737 = vmatprep.subr.mxu0 %v439
        %738 = vmatpush1.msra.mxu0 %v438
        %739 = vmatprep.subr.mxu0 %v443
        %740 = vmatpush1.msra.mxu0 %v442
        %741 = vmatprep.subr.mxu0 %v447
        %742 = vmatpush1.msra.mxu0 %v446
        %743 = vmatprep.subr.mxu0 %v451
        %744 = vmatpush1.msra.mxu0 %v450
        %745 = vmatprep.subr.mxu0 %v455
        %746 = vmatpush1.msra.mxu0 %v454
        %747 = vmatprep.subr.mxu0 %v459
        %748 = vmatpush1.msra.mxu0 %v458
        %749 = vmatprep.subr.mxu0 %v463
        %750 = vmatpush1.msra.mxu0 %v462
        %751 = vmatprep.subr.mxu0 %v467
        %752 = vmatpush1.msra.mxu0 %v466
        %753 = vmatprep.subr.mxu0 %v471
        %754 = vmatpush1.msra.mxu0 %v470
        %755 = vmatprep.subr.mxu0 %v475
        %756 = vmatpush1.msra.mxu0 %v474
        %757 = vmatprep.subr.mxu0 %v479
        %758 = vmatpush1.msra.mxu0 %v478
        %759 = vmatprep.subr.mxu0 %v483
        %760 = vmatpush1.msra.mxu0 %v482
        %761 = vmatprep.mubr.f32.mxu0 %v227
        %762 = vmatmul.mubr.f32.gmra.mrb[0].mxu0 %v226
        %v763 = vpop.f32.mrb[0].mxu0
        %v764 = vadd.f32 %v693, %v763
        %v765 = vpop.f32.mrb[0].mxu0
        %v766 = vadd.f32 %v695, %v765
        %767 = vdwg.mxu0
        %768 = vst [vmem:[%s223] sm:$0xff] %v622
        %s769 = scalar_lea.vmem %s223, 8
        %770 = vst [vmem:[%s769] sm:$0xff] %v624
        %s771 = scalar_lea.vmem %s223, 16
        %772 = vst [vmem:[%s771] sm:$0xff] %v764
        %s773 = scalar_lea.vmem %s223, 24
        %774 = vst [vmem:[%s773] sm:$0xff] %v766
        %p775 = scmp.lt.s32.totalorder %s19, 1
        %s776 = scalar_select %p775, %s19, 1
        %p777 = scmp.lt.s32.totalorder %s20, 0
        %s778 = scalar_select %p777, %s20, 0
        %p779 = scmp.lt.s32.totalorder %s21, 0
        %s780 = scalar_select %p779, %s21, 0
        %s781 = sadd.s32 %s780, %s778
        %s782 = smul.addr %s776, 4
        %s783 = sadd.s32 %s781, %s782
        %s784 = smul.addr %s783, 8
        %s785 = scalar_lea.vmem %s2, %s784
        // Predicated region
        $region33: #{dwpt_1d.1} parent=27 // pred_check
          %p786 = pneg %p106
        $region34: #{dwpt_1d.1} parent=27 // pred_check_branch
          %788 = sbr.rel (%p786) target = $region36
        $region35: #{dwpt_1d.1} parent=27 // pred_region
          _
        $region36: #{dwpt_1d.1} parent=27 // pred_fallthru
          _
      $region28: #{dwpt_1d.1} parent=5 // pred_fallthru
        _
      %p789 = scmp.le.s32.totalorder 2, %s9
      // Predicated region
      $region37: #{dwpt_1d.1} parent=5 // pred_check
        %p790 = pneg %p789
      $region38: #{dwpt_1d.1} parent=5 // pred_check_branch
        %792 = sbr.rel (%p790) target = $region40
      $region39: #{dwpt_1d.1} parent=5 // pred_region
        %s793 = ssub.s32 %s9, 2
        // Predicated region
        $region41: #{dwpt_1d.1} parent=39 // pred_check
          %p794 = pneg %p112
        $region42: #{dwpt_1d.1} parent=39 // pred_check_branch
          %796 = sbr.rel (%p794) target = $region44
        $region43: #{dwpt_1d.1} parent=39 // pred_region
          %p797 = scmp.lt.s32.totalorder %s22, 1
          %s798 = scalar_select %p797, %s22, 1
          %p799 = scmp.lt.s32.totalorder %s23, 0
          %s800 = scalar_select %p799, %s23, 0
          %p801 = scmp.lt.s32.totalorder %s24, 0
          %s802 = scalar_select %p801, %s24, 0
          %s803 = sadd.s32 %s802, %s800
          %s804 = smul.addr %s798, 4
          %s805 = sadd.s32 %s803, %s804
          %s806 = smul.addr %s805, 8
          %s807 = scalar_lea.vmem %s2, %s806
        $region44: #{dwpt_1d.1} parent=39 // pred_fallthru
          _
      $region40: #{dwpt_1d.1} parent=5 // pred_fallthru
        _
    $region6: #{dwpt_1d.1} parent=1 // loop_footer
      %s13 = sadd.s32 1, %s9
    $region7: #{dwpt_1d.1} parent=1 // loop_footer_branch
      %8 = sbr.rel target = $region3
    $region8: #{dwpt_1d.1} parent=1 // loop_exit
      _
    %808 = vsyncpa [#allocation3], 1
    %s809 = scalar_lea.sflag [#allocation3], 1
    %810 = vsyncpa %s809, 1

</llo_original>
